<compile_context>
chip_gen: v7x
topology: tpu7x:2x2x1
jax: 0.10.0
libtpu: 0.0.40
codegen_flags: <defaults>
</compile_context>

<pallas_src>
import jax
import jax.numpy as jnp
from jax import lax
from jax.experimental import pallas as pl
from jax.experimental.pallas import tpu as pltpu


# ----------------------------------------------------------------------------
# Pallas kernel: grid = (batch, query_tile).
# ----------------------------------------------------------------------------
def _self_attention_kernel(x_ref,      # (TQ, C)      f32  query-tile features (residual + theta)
                           xw_ref,     # (4, HW4, C)  bf16 2x2-window-grouped features
                           tw_ref,     # (C,  C8)     bf16 theta weight (in, out)
                           pgw_ref,    # (C,  C8+C2)  bf16 fused [phi | g] weight (in, out)
                           ow_ref,     # (C2, C)      bf16 o weight (in, out)
                           gamma_ref,  # (1,)         f32  scalar in SMEM
                           o_ref,      # (TQ, C)
                           phi_ref,    # scratch VMEM (HW4, C8) f32
                           g_ref):     # scratch VMEM (HW4, C2) bf16
    C8 = tw_ref.shape[1]

    # --- once per batch element (first query tile): fused phi|g projection
    #     followed by the 2x2 max-pool (max over the 4 window positions).
    @pl.when(pl.program_id(1) == 0)
    def _():
        w = pgw_ref[...]                                            # (C, C8+C2) bf16
        acc = jnp.dot(xw_ref[0], w, preferred_element_type=jnp.float32)
        for j in range(1, 4):                                       # short fixed unroll
            acc = jnp.maximum(
                acc, jnp.dot(xw_ref[j], w, preferred_element_type=jnp.float32))
        phi_ref[...] = acc[:, :C8]                                  # (HW4, C8) f32
        g_ref[...] = acc[:, C8:].astype(jnp.bfloat16)               # (HW4, C2) bf16

    x = x_ref[...]                                                  # f32 (residual path)
    xb = x.astype(jnp.bfloat16)

    # theta: 1x1 conv over the query tile (bf16 in, f32 acc).
    theta = jnp.dot(xb, tw_ref[...], preferred_element_type=jnp.float32)   # (TQ, C8)

    # attn = softmax(theta . phi^T) over the downsampled key axis.
    # logits / softmax kept in f32 (exp-sensitive path); contraction dim is tiny.
    logits = lax.dot_general(theta, phi_ref[...], (((1,), (1,)), ((), ())),
                             preferred_element_type=jnp.float32)           # (TQ, HW4)
    m = jnp.max(logits, axis=-1, keepdims=True)
    e = jnp.exp(logits - m)
    inv_l = pl.reciprocal(jnp.sum(e, axis=-1, keepdims=True), approx=True)  # (TQ, 1)

    # attn @ g with the 1/sum normalization folded in afterwards (row scaling
    # commutes with the right-matmuls).
    attn_g = jnp.dot(e.astype(jnp.bfloat16), g_ref[...],
                     preferred_element_type=jnp.float32) * inv_l            # (TQ, C2)

    # output 1x1 conv + gated residual (residual in exact f32).
    out = jnp.dot(attn_g.astype(jnp.bfloat16), ow_ref[...],
                  preferred_element_type=jnp.float32)                       # (TQ, C)
    o_ref[...] = (x + gamma_ref[0] * out).astype(o_ref.dtype)


# ----------------------------------------------------------------------------
# Wrapper: layout plumbing + pallas_call.
# ----------------------------------------------------------------------------
def self_attention_pallas(x_nchw, theta_w, phi_w, g_w, o_w, gamma, *, q_tile=512):
    """x_nchw: (N, C, H, W); weights given as (out_ch, in_ch) for the 1x1 convs."""
    N, C, H, W = x_nchw.shape
    assert H % 2 == 0 and W % 2 == 0
    HW = H * W
    HW4 = HW // 4
    C8 = C >> 3
    C2 = C >> 1

    # Query-tile size: whole HW when small, otherwise a divisor sized for VMEM
    # (caps the (TQ, HW4) logits tile independent of feature-map size).
    tq = HW
    for cand in (q_tile, 256, 128, 64):
        if HW > cand and HW % cand == 0 and cand % 8 == 0:
            tq = cand
            break
    num_q = HW // tq

    # NCHW -> NHWC; channels on the lane dim.
    x_nhwc = jnp.transpose(x_nchw, (0, 2, 3, 1))                    # (N, H, W, C)
    x_flat = x_nhwc.reshape(N, HW, C).astype(jnp.float32)           # f32: residual + theta
    # Group the four 2x2-window positions on a leading axis (keys/values path),
    # shipped in bf16 (matmul-only operand, half the HBM traffic of f32).
    x_win = x_nhwc.reshape(N, H // 2, 2, W // 2, 2, C)
    x_win = jnp.transpose(x_win, (0, 2, 4, 1, 3, 5)).reshape(N, 4, HW4, C)
    x_win = x_win.astype(jnp.bfloat16)

    # Weights transposed to (in, out); phi and g fused into one matrix; bf16.
    tw = jnp.transpose(theta_w).astype(jnp.bfloat16)                # (C, C8)
    pgw = jnp.concatenate([jnp.transpose(phi_w), jnp.transpose(g_w)],
                          axis=1).astype(jnp.bfloat16)              # (C, C8+C2)
    ow = jnp.transpose(o_w).astype(jnp.bfloat16)                    # (C2, C)
    gamma_arr = jnp.asarray([gamma], dtype=jnp.float32)

    out_flat = pl.pallas_call(
        _self_attention_kernel,
        out_shape=jax.ShapeDtypeStruct((N, HW, C), x_nchw.dtype),
        grid_spec=pltpu.PrefetchScalarGridSpec(
            num_scalar_prefetch=0,
            grid=(N, num_q),
            in_specs=[
                pl.BlockSpec((None, tq, C), lambda n, q: (n, q, 0)),
                pl.BlockSpec((None, 4, HW4, C), lambda n, q: (n, 0, 0, 0)),
                pl.BlockSpec((C, C8), lambda n, q: (0, 0)),
                pl.BlockSpec((C, C8 + C2), lambda n, q: (0, 0)),
                pl.BlockSpec((C2, C), lambda n, q: (0, 0)),
                pl.BlockSpec(memory_space=pltpu.MemorySpace.SMEM),
            ],
            out_specs=pl.BlockSpec((None, tq, C), lambda n, q: (n, q, 0)),
            scratch_shapes=[
                pltpu.VMEM((HW4, C8), jnp.float32),   # pooled phi
                pltpu.VMEM((HW4, C2), jnp.bfloat16),  # pooled g
            ],
        ),
        compiler_params=pltpu.CompilerParams(
            dimension_semantics=("parallel", "arbitrary"),
            vmem_limit_bytes=48 * 1024 * 1024),
    )(x_flat, x_win, tw, pgw, ow, gamma_arr)

    out_nhwc = out_flat.reshape(N, H, W, C)
    return jnp.transpose(out_nhwc, (0, 3, 1, 2)).astype(x_nchw.dtype)   # back to NCHW


# ----------------------------------------------------------------------------
# Parameter setup (spectral norm = divide weight by its largest singular value,
# mirroring nn.utils.spectral_norm's power-iteration reparameterization).
# ----------------------------------------------------------------------------
def spectral_normalize(w, n_iter=20):
    u = jnp.ones((w.shape[0],), w.dtype)
    for _ in range(n_iter):
        v = w.T @ u
        v = v / (jnp.linalg.norm(v) + 1e-12)
        u = w @ v
        u = u / (jnp.linalg.norm(u) + 1e-12)
    sigma = u @ (w @ v)
    return w / sigma


# ----------------------------------------------------------------------------
# Pure-JAX reference (mirrors the PyTorch forward, NCHW).  `matmul_dtype`
# rounds the matmul operands the same way the kernel does (bf16 inputs with
# f32 accumulation); the residual add always uses exact f32 x.
# ----------------------------------------------------------------------------
def self_attention_reference(x, theta_w, phi_w, g_w, o_w, gamma,
                             matmul_dtype=jnp.float32):
    N, C, H, W = x.shape
    HW = H * W

    def rd(a):
        return a.astype(matmul_dtype).astype(jnp.float32)

    xm = rd(x)
    tw, pw, gw, ow = rd(theta_w), rd(phi_w), rd(g_w), rd(o_w)

    def conv1x1(inp, w):  # inp (N, Cin, HW), w (Cout, Cin)
        return jnp.einsum('oi,nil->nol', w, inp)

    def maxpool2x2(inp):  # (N, D, H, W)
        n, d, h, w2 = inp.shape
        r = inp.reshape(n, d, h // 2, 2, w2 // 2, 2)
        return jnp.max(jnp.max(r, axis=5), axis=3)

    x2 = xm.reshape(N, C, HW)
    theta = conv1x1(x2, tw)                                        # (N, C8, HW)
    phi = conv1x1(x2, pw).reshape(N, -1, H, W)
    phi = maxpool2x2(phi).reshape(N, -1, HW // 4)                  # (N, C8, HW4)
    attn = jnp.einsum('ncq,nck->nqk', theta, phi)                  # (N, HW, HW4)
    attn = jax.nn.softmax(attn, axis=-1)
    g = conv1x1(x2, gw).reshape(N, -1, H, W)
    g = maxpool2x2(g).reshape(N, -1, HW // 4)                      # (N, C2, HW4)
    attn_g = jnp.einsum('nck,nqk->ncq', g, attn)                   # (N, C2, HW)
    out = jnp.einsum('oc,ncq->noq', ow, attn_g).reshape(N, C, H, W)
    return x + gamma * out


# ----------------------------------------------------------------------------
if __name__ == "__main__":
    N, C, H, W = 2, 64, 8, 8          # num_feat = 64 -> C>>3 = 8, C>>1 = 32

    key = jax.random.PRNGKey(0)
    kx, kt, kp, kg, ko = jax.random.split(key, 5)
    x = jax.random.normal(kx, (N, C, H, W), dtype=jnp.float32)

    theta_w = spectral_normalize(0.1 * jax.random.normal(kt, (C >> 3, C), jnp.float32))
    phi_w = spectral_normalize(0.1 * jax.random.normal(kp, (C >> 3, C), jnp.float32))
    g_w = spectral_normalize(0.1 * jax.random.normal(kg, (C >> 1, C), jnp.float32))
    o_w = spectral_normalize(0.1 * jax.random.normal(ko, (C, C >> 1), jnp.float32))
    # Module initializes gamma to 0.0; use a nonzero value so the attention
    # path is actually exercised numerically.
    gamma = 0.75

    y = jax.block_until_ready(self_attention_pallas(x, theta_w, phi_w, g_w, o_w, gamma))

    # Reference with the same bf16 rounding applied to matmul operands (the
    # kernel runs bf16-in / f32-accumulate matmuls, f32 softmax, f32 residual).
    y_ref = jax.block_until_ready(
        self_attention_reference(x, theta_w, phi_w, g_w, o_w, gamma,
                                 matmul_dtype=jnp.bfloat16))

    assert y.shape == (N, C, H, W) and y.dtype == x.dtype
    max_err = float(jnp.max(jnp.abs(y - y_ref)))
    assert jnp.allclose(y, y_ref, rtol=2e-2, atol=2e-2), max_err

    print("KERNEL_OK")
</pallas_src>

<mosaic_0001>
module attributes {stable_mosaic.version = 11 : i64} {
  func.func @_self_attention_kernel(%arg0: i32, %arg1: i32, %arg2: memref<1x64x64xf32, #tpu.memory_space<vmem>>, %arg3: memref<1x4x16x64xbf16, #tpu.memory_space<vmem>>, %arg4: memref<64x8xbf16, #tpu.memory_space<vmem>>, %arg5: memref<64x40xbf16, #tpu.memory_space<vmem>>, %arg6: memref<32x64xbf16, #tpu.memory_space<vmem>>, %arg7: memref<1xf32, #tpu.memory_space<smem>>, %arg8: memref<1x64x64xf32, #tpu.memory_space<vmem>>, %arg9: memref<16x8xf32, #tpu.memory_space<vmem>>, %arg10: memref<16x32xbf16, #tpu.memory_space<vmem>>) attributes {dimension_semantics = [#tpu.dimension_semantics<parallel>, #tpu.dimension_semantics<arbitrary>], iteration_bounds = array<i64: 2, 1>, scalar_prefetch = 0 : i64, scratch_operands = 2 : i64, tpu.core_type = #tpu.core_type<tc>, window_params = [{transform_indices = @transform_0, window_bounds = array<i64: 1, 64, 64>}, {transform_indices = @transform_1, window_bounds = array<i64: 1, 4, 16, 64>}, {pipeline_mode = #tpu.pipeline_mode<synchronous>, transform_indices = @transform_2, window_bounds = array<i64: 64, 8>}, {pipeline_mode = #tpu.pipeline_mode<synchronous>, transform_indices = @transform_3, window_bounds = array<i64: 64, 40>}, {pipeline_mode = #tpu.pipeline_mode<synchronous>, transform_indices = @transform_4, window_bounds = array<i64: 32, 64>}, {transform_indices = @transform_5, window_bounds = array<i64: 1>}, {transform_indices = @transform_6, window_bounds = array<i64: 1, 64, 64>}]} {
    %c0_i32 = arith.constant 0 : i32
    %0 = arith.cmpi eq, %arg1, %c0_i32 : i32
    %1 = arith.extui %0 : i1 to i32
    %c0_i32_0 = arith.constant 0 : i32
    %2 = arith.cmpi ne, %1, %c0_i32_0 : i32
    scf.if %2 {
      %c0_20 = arith.constant 0 : index
      %c0_21 = arith.constant 0 : index
      %33 = vector.load %arg5[%c0_20, %c0_21] : memref<64x40xbf16, #tpu.memory_space<vmem>>, vector<64x40xbf16>
      %c0_22 = arith.constant 0 : index
      %c0_23 = arith.constant 0 : index
      %c0_24 = arith.constant 0 : index
      %c0_25 = arith.constant 0 : index
      %34 = vector.load %arg3[%c0_22, %c0_23, %c0_24, %c0_25] : memref<1x4x16x64xbf16, #tpu.memory_space<vmem>>, vector<1x1x16x64xbf16>
      %35 = vector.shape_cast %34 : vector<1x1x16x64xbf16> to vector<16x64xbf16>
      %cst_26 = arith.constant dense<0.000000e+00> : vector<16x40xf32>
      %36 = tpu.matmul %35, %33, %cst_26 {dimension_numbers = #tpu.dot_dimension_numbers<[1], [0], [0], [1], [0, 0, 1, 1], [], []>} : vector<16x64xbf16>, vector<64x40xbf16>, vector<16x40xf32> -> vector<16x40xf32>
      %c0_27 = arith.constant 0 : index
      %c1 = arith.constant 1 : index
      %c0_28 = arith.constant 0 : index
      %c0_29 = arith.constant 0 : index
      %37 = vector.load %arg3[%c0_27, %c1, %c0_28, %c0_29] : memref<1x4x16x64xbf16, #tpu.memory_space<vmem>>, vector<1x1x16x64xbf16>
      %38 = vector.shape_cast %37 : vector<1x1x16x64xbf16> to vector<16x64xbf16>
      %cst_30 = arith.constant dense<0.000000e+00> : vector<16x40xf32>
      %39 = tpu.matmul %38, %33, %cst_30 {dimension_numbers = #tpu.dot_dimension_numbers<[1], [0], [0], [1], [0, 0, 1, 1], [], []>} : vector<16x64xbf16>, vector<64x40xbf16>, vector<16x40xf32> -> vector<16x40xf32>
      %40 = arith.maximumf %36, %39 : vector<16x40xf32>
      %c0_31 = arith.constant 0 : index
      %c2 = arith.constant 2 : index
      %c0_32 = arith.constant 0 : index
      %c0_33 = arith.constant 0 : index
      %41 = vector.load %arg3[%c0_31, %c2, %c0_32, %c0_33] : memref<1x4x16x64xbf16, #tpu.memory_space<vmem>>, vector<1x1x16x64xbf16>
      %42 = vector.shape_cast %41 : vector<1x1x16x64xbf16> to vector<16x64xbf16>
      %cst_34 = arith.constant dense<0.000000e+00> : vector<16x40xf32>
      %43 = tpu.matmul %42, %33, %cst_34 {dimension_numbers = #tpu.dot_dimension_numbers<[1], [0], [0], [1], [0, 0, 1, 1], [], []>} : vector<16x64xbf16>, vector<64x40xbf16>, vector<16x40xf32> -> vector<16x40xf32>
      %44 = arith.maximumf %40, %43 : vector<16x40xf32>
      %c0_35 = arith.constant 0 : index
      %c3 = arith.constant 3 : index
      %c0_36 = arith.constant 0 : index
      %c0_37 = arith.constant 0 : index
      %45 = vector.load %arg3[%c0_35, %c3, %c0_36, %c0_37] : memref<1x4x16x64xbf16, #tpu.memory_space<vmem>>, vector<1x1x16x64xbf16>
      %46 = vector.shape_cast %45 : vector<1x1x16x64xbf16> to vector<16x64xbf16>
      %cst_38 = arith.constant dense<0.000000e+00> : vector<16x40xf32>
      %47 = tpu.matmul %46, %33, %cst_38 {dimension_numbers = #tpu.dot_dimension_numbers<[1], [0], [0], [1], [0, 0, 1, 1], [], []>} : vector<16x64xbf16>, vector<64x40xbf16>, vector<16x40xf32> -> vector<16x40xf32>
      %48 = arith.maximumf %44, %47 : vector<16x40xf32>
      %49 = vector.extract_strided_slice %48 {offsets = [0, 0], sizes = [16, 8], strides = [1, 1]} : vector<16x40xf32> to vector<16x8xf32>
      %c0_39 = arith.constant 0 : index
      %c0_40 = arith.constant 0 : index
      %50 = vector.load %arg9[%c0_39, %c0_40] : memref<16x8xf32, #tpu.memory_space<vmem>>, vector<16x8xf32>
      tpu.vector_store %arg9[%c0_39, %c0_40], %49 {strides = array<i32>} : memref<16x8xf32, #tpu.memory_space<vmem>>, vector<16x8xf32>,
      %51 = vector.extract_strided_slice %48 {offsets = [0, 8], sizes = [16, 32], strides = [1, 1]} : vector<16x40xf32> to vector<16x32xf32>
      %52 = arith.truncf %51 : vector<16x32xf32> to vector<16x32xbf16>
      %c0_41 = arith.constant 0 : index
      %c0_42 = arith.constant 0 : index
      %53 = vector.load %arg10[%c0_41, %c0_42] : memref<16x32xbf16, #tpu.memory_space<vmem>>, vector<16x32xbf16>
      tpu.vector_store %arg10[%c0_41, %c0_42], %52 {strides = array<i32>} : memref<16x32xbf16, #tpu.memory_space<vmem>>, vector<16x32xbf16>,
    } else {
    }
    %c0 = arith.constant 0 : index
    %c0_1 = arith.constant 0 : index
    %c0_2 = arith.constant 0 : index
    %3 = vector.load %arg2[%c0, %c0_1, %c0_2] : memref<1x64x64xf32, #tpu.memory_space<vmem>>, vector<1x64x64xf32>
    %4 = vector.shape_cast %3 : vector<1x64x64xf32> to vector<64x64xf32>
    %5 = arith.truncf %4 : vector<64x64xf32> to vector<64x64xbf16>
    %c0_3 = arith.constant 0 : index
    %c0_4 = arith.constant 0 : index
    %6 = vector.load %arg4[%c0_3, %c0_4] : memref<64x8xbf16, #tpu.memory_space<vmem>>, vector<64x8xbf16>
    %cst = arith.constant dense<0.000000e+00> : vector<64x8xf32>
    %7 = tpu.matmul %5, %6, %cst {dimension_numbers = #tpu.dot_dimension_numbers<[1], [0], [0], [1], [0, 0, 1, 1], [], []>} : vector<64x64xbf16>, vector<64x8xbf16>, vector<64x8xf32> -> vector<64x8xf32>
    %c0_5 = arith.constant 0 : index
    %c0_6 = arith.constant 0 : index
    %8 = vector.load %arg9[%c0_5, %c0_6] : memref<16x8xf32, #tpu.memory_space<vmem>>, vector<16x8xf32>
    %cst_7 = arith.constant dense<0.000000e+00> : vector<64x16xf32>
    %9 = tpu.matmul %7, %8, %cst_7 {dimension_numbers = #tpu.dot_dimension_numbers<[1], [1], [0], [0], [0, 0, 1, 0], [], []>} : vector<64x8xf32>, vector<16x8xf32>, vector<64x16xf32> -> vector<64x16xf32>
    %cst_8 = arith.constant dense<0xFF800000> : vector<64xf32>
    %10 = vector.multi_reduction <maximumf>, %9, %cst_8 [1] : vector<64x16xf32> to vector<64xf32>
    %11 = vector.shape_cast %10 : vector<64xf32> to vector<64x1xf32>
    %12 = vector.broadcast %11 : vector<64x1xf32> to vector<64x16xf32>
    %13 = arith.subf %9, %12 : vector<64x16xf32>
    %14 = math.exp %13 : vector<64x16xf32>
    %cst_9 = arith.constant dense<0.000000e+00> : vector<64xf32>
    %15 = vector.multi_reduction <add>, %14, %cst_9 [1] : vector<64x16xf32> to vector<64xf32>
    %16 = vector.shape_cast %15 : vector<64xf32> to vector<64x1xf32>
    %17 = tpu.reciprocal %16 {approx = true} : vector<64x1xf32> -> vector<64x1xf32>
    %18 = arith.truncf %14 : vector<64x16xf32> to vector<64x16xbf16>
    %c0_10 = arith.constant 0 : index
    %c0_11 = arith.constant 0 : index
    %19 = vector.load %arg10[%c0_10, %c0_11] : memref<16x32xbf16, #tpu.memory_space<vmem>>, vector<16x32xbf16>
    %cst_12 = arith.constant dense<0.000000e+00> : vector<64x32xf32>
    %20 = tpu.matmul %18, %19, %cst_12 {dimension_numbers = #tpu.dot_dimension_numbers<[1], [0], [0], [1], [0, 0, 1, 1], [], []>} : vector<64x16xbf16>, vector<16x32xbf16>, vector<64x32xf32> -> vector<64x32xf32>
    %21 = vector.broadcast %17 : vector<64x1xf32> to vector<64x32xf32>
    %22 = arith.mulf %20, %21 : vector<64x32xf32>
    %23 = arith.truncf %22 : vector<64x32xf32> to vector<64x32xbf16>
    %c0_13 = arith.constant 0 : index
    %c0_14 = arith.constant 0 : index
    %24 = vector.load %arg6[%c0_13, %c0_14] : memref<32x64xbf16, #tpu.memory_space<vmem>>, vector<32x64xbf16>
    %cst_15 = arith.constant dense<0.000000e+00> : vector<64x64xf32>
    %25 = tpu.matmul %23, %24, %cst_15 {dimension_numbers = #tpu.dot_dimension_numbers<[1], [0], [0], [1], [0, 0, 1, 1], [], []>} : vector<64x32xbf16>, vector<32x64xbf16>, vector<64x64xf32> -> vector<64x64xf32>
    %c0_16 = arith.constant 0 : index
    %26 = memref.load %arg7[%c0_16] : memref<1xf32, #tpu.memory_space<smem>>
    %27 = vector.broadcast %26 : f32 to vector<64x64xf32>
    %28 = arith.mulf %27, %25 : vector<64x64xf32>
    %29 = arith.addf %4, %28 : vector<64x64xf32>
    %c0_17 = arith.constant 0 : index
    %c0_18 = arith.constant 0 : index
    %c0_19 = arith.constant 0 : index
    %30 = vector.load %arg8[%c0_17, %c0_18, %c0_19] : memref<1x64x64xf32, #tpu.memory_space<vmem>>, vector<1x64x64xf32>
    %31 = vector.shape_cast %30 : vector<1x64x64xf32> to vector<64x64xf32>
    %32 = vector.shape_cast %29 : vector<64x64xf32> to vector<1x64x64xf32>
    tpu.vector_store %arg8[%c0_17, %c0_18, %c0_19], %32 {strides = array<i32>} : memref<1x64x64xf32, #tpu.memory_space<vmem>>, vector<1x64x64xf32>,
    return
  }
  func.func @transform_0(%arg0: i32, %arg1: i32) -> (i32, i32, i32) {
    %c0_i32 = arith.constant 0 : i32
    %c0_i32_0 = arith.constant 0 : i32
    return %arg0, %arg1, %c0_i32 : i32, i32, i32
  }
  func.func @transform_1(%arg0: i32, %arg1: i32) -> (i32, i32, i32, i32) {
    %c0_i32 = arith.constant 0 : i32
    %c0_i32_0 = arith.constant 0 : i32
    %c0_i32_1 = arith.constant 0 : i32
    %c0_i32_2 = arith.constant 0 : i32
    return %arg0, %c0_i32, %c0_i32_0, %c0_i32_1 : i32, i32, i32, i32
  }
  func.func @transform_2(%arg0: i32, %arg1: i32) -> (i32, i32) {
    %c0_i32 = arith.constant 0 : i32
    %c0_i32_0 = arith.constant 0 : i32
    %c0_i32_1 = arith.constant 0 : i32
    return %c0_i32, %c0_i32_0 : i32, i32
  }
  func.func @transform_3(%arg0: i32, %arg1: i32) -> (i32, i32) {
    %c0_i32 = arith.constant 0 : i32
    %c0_i32_0 = arith.constant 0 : i32
    %c0_i32_1 = arith.constant 0 : i32
    return %c0_i32, %c0_i32_0 : i32, i32
  }
  func.func @transform_4(%arg0: i32, %arg1: i32) -> (i32, i32) {
    %c0_i32 = arith.constant 0 : i32
    %c0_i32_0 = arith.constant 0 : i32
    %c0_i32_1 = arith.constant 0 : i32
    return %c0_i32, %c0_i32_0 : i32, i32
  }
  func.func @transform_5(%arg0: i32, %arg1: i32) -> i32 {
    %c0_i32 = arith.constant 0 : i32
    %c0_i32_0 = arith.constant 0 : i32
    return %c0_i32 : i32
  }
  func.func @transform_6(%arg0: i32, %arg1: i32) -> (i32, i32, i32) {
    %c0_i32 = arith.constant 0 : i32
    %c0_i32_0 = arith.constant 0 : i32
    return %arg0, %arg1, %c0_i32 : i32, i32, i32
  }
}

</mosaic_0001>

<llo_original>
// kernel: tpu_custom_call.1
$region0: #{tpu_custom_call.1}
  #allocation0 [shape = 'u32[]', space=smem, size = 0x4, offset = 0x4, fixed_abs, tag = 'smem constant byte address 0x4 - core index']
  #allocation1 [shape = 'u32[144,128]{1,0:T(1,128)}', space=vmem, size = 0x12000, scoped, tag = 'internal scratch']
  #allocation2 [shape = 'f32[16,8]{1,0:T(8,128)}', space=vmem, size = 0x2000, scoped, tag = 'scratch operand']
  #allocation3 [shape = 'bf16[16,32]{1,0:T(16,128)(2,1)}', space=vmem, size = 0x1000, scoped, tag = 'scratch operand']
  #allocation4 [shape = 'f32[1]{0:T(128)S(6)}', space=smem, size = 0x200, scoped, tag = 'scoped memory for tpu_custom_call.1']
  %s0 = inlined_call_operand.hbm [shape: f32[2,64,64], index: 0, kind: input, shape index: {}]
  %s1 = inlined_call_operand.vmem [shape: bf16[2,4,16,64], index: 1, kind: input, shape index: {}]
  %s2 = inlined_call_operand.vmem [shape: bf16[64,8], index: 2, kind: input, shape index: {}]
  %s3 = inlined_call_operand.vmem [shape: bf16[64,40], index: 3, kind: input, shape index: {}]
  %s4 = inlined_call_operand.vmem [shape: bf16[32,64], index: 4, kind: input, shape index: {}]
  %s5 = inlined_call_operand.<no memory space> [shape: f32[1], index: 5, kind: input, shape index: {}]
  %s6 = inlined_call_operand.hbm [shape: f32[2,64,64], index: 6, kind: output, shape index: {}]
  %s7 = sld [smem:[#allocation0]]
  $region65: #{tpu_custom_call.1} parent=0
    _
  %s9 = ssub.s32 1, %s7
  %s10 = scalar_select 0, %s9, %s7
  %11 = sst [smem:[#allocation4]] %s5
  $region1: #{tpu_custom_call.1} parent=0
    #allocation5 [shape = 'u8[65536]{0}', space=vmem, size = 0x10000, scoped, tag = 'input window, operand 0']
    #allocation6 [shape = 's32[2]{0}', space=sflag, size = 0x8, scoped, tag = 'scoped memory for tpu_custom_call.1']
    #allocation7 [shape = 's32[2]{0}', space=sflag, size = 0x8, scoped, tag = 'scoped memory for tpu_custom_call.1']
    #allocation8 [shape = 'u8[65536]{0}', space=vmem, size = 0x10000, scoped, tag = 'output window, operand 0']
    %12 = vsyncpa [#allocation6], 0
    %s13 = scalar_lea.sflag [#allocation6], 1
    %14 = vsyncpa %s13, 0
    %15 = vsyncpa [#allocation7], 0
    %s16 = scalar_lea.sflag [#allocation7], 1
    %17 = vsyncpa %s16, 0
    loop: start=0, step=1, limit=4
    $region2: #{tpu_custom_call.1} parent=1 // loop_pre_header
      _
    $region3: #{tpu_custom_call.1} parent=1 // loop_header
      %s19 = sphi 0, %s23
      %p20 = scmp.ge.s32.totalorder %s19, 4
      %s26 = sphi 0, %s38
      %s27 = sphi 0, %s34
      %s28 = sphi 0, %s26
      %s29 = sphi 0, %s27
      %s30 = sphi 0, %s28
      %s31 = sphi 0, %s29
      %s43 = sphi 0, %s45
      %s46 = sphi 0, %s43
      %s47 = sphi 0, %s46
      %s63 = sphi 0, %s47
      %s69 = sphi 0, %s71
      %s72 = sphi 0, %s69
      %s73 = sphi 0, %s72
      %s89 = sphi 0, %s73
      %s93 = sphi 0, %s93
      %s95 = sphi 0, %s93
      %s96 = sphi 0, %s95
      %s110 = sphi 0, %s96
      %s114 = sphi 0, %s114
      %s116 = sphi 0, %s114
      %s117 = sphi 0, %s116
      %s131 = sphi 0, %s117
      %s135 = sphi 0, %s135
      %s137 = sphi 0, %s135
      %s138 = sphi 0, %s137
      %s152 = sphi 0, %s138
      %s156 = sphi 0, %s156
      %s158 = sphi 0, %s156
      %s159 = sphi 0, %s158
      %s173 = sphi 0, %s159
      %s181 = sphi 0, %s183
      %s184 = sphi 0, %s181
      %s185 = sphi 0, %s184
      %s201 = sphi 0, %s185
    $region4: #{tpu_custom_call.1} parent=1 // loop_header_branch
      %22 = sbr.rel (%p20) target = $region8
    $region5: #{tpu_custom_call.1} parent=1 // loop_body
      %s24 = ssub.s32 %s19, 1
      %s25 = ssub.s32 %s19, 2
      %s32 = sadd.s32 1, %s27
      %p33 = scmp.ge.s32.totalorder %s32, 1
      %s34 = scalar_select %p33, 0, %s32
      %s35 = sadd.s32 1, %s26
      %s36 = scalar_select %p33, %s35, %s26
      %p37 = scmp.ge.s32.totalorder %s36, 2
      %s38 = scalar_select %p37, 0, %s36
      %s39 = ssub.s32 %s26, %s38
      %s40 = ssub.s32 %s27, %s34
      %s41 = sor.u32 %s39, %s40
      %p42 = scmp.eq.s32.totalorder %s41, 0
      %s44 = sadd.s32 %s43, 1
      %s45 = scalar_select %p42, %s43, %s44
      %p48 = pneg %p42
      %p49 = scmp.eq.s32.totalorder %s19, 1
      %p50 = por %p48, %p49
      %p51 = scmp.ne.s32.totalorder %s43, %s46
      %p52 = scmp.eq.s32.totalorder %s19, 0
      %p53 = por %p51, %p52
      %p54 = scmp.ne.s32.totalorder %s43, %s46
      %p55 = scmp.eq.s32.totalorder %s24, 1
      %p56 = por %p54, %p55
      %p57 = scmp.ne.s32.totalorder %s46, %s47
      %p58 = scmp.eq.s32.totalorder %s24, 0
      %p59 = por %p57, %p58
      %p60 = scmp.ne.s32.totalorder %s46, %s47
      %p61 = scmp.eq.s32.totalorder %s25, 1
      %p62 = por %p60, %p61
      %p64 = scmp.ne.s32.totalorder %s47, %s63
      %p65 = scmp.eq.s32.totalorder %s25, 0
      %p66 = por %p64, %p65
      %s67 = ssub.s32 %s26, %s38
      %p68 = scmp.eq.s32.totalorder %s67, 0
      %s70 = sadd.s32 %s69, 1
      %s71 = scalar_select %p68, %s69, %s70
      %p74 = pneg %p68
      %p75 = scmp.eq.s32.totalorder %s19, 1
      %p76 = por %p74, %p75
      %p77 = scmp.ne.s32.totalorder %s69, %s72
      %p78 = scmp.eq.s32.totalorder %s19, 0
      %p79 = por %p77, %p78
      %p80 = scmp.ne.s32.totalorder %s69, %s72
      %p81 = scmp.eq.s32.totalorder %s24, 1
      %p82 = por %p80, %p81
      %p83 = scmp.ne.s32.totalorder %s72, %s73
      %p84 = scmp.eq.s32.totalorder %s24, 0
      %p85 = por %p83, %p84
      %p86 = scmp.ne.s32.totalorder %s72, %s73
      %p87 = scmp.eq.s32.totalorder %s25, 1
      %p88 = por %p86, %p87
      %p90 = scmp.ne.s32.totalorder %s73, %s89
      %p91 = scmp.eq.s32.totalorder %s25, 0
      %p92 = por %p90, %p91
      %s94 = sadd.s32 %s93, 1
      %p97 = scmp.eq.s32.totalorder %s19, 1
      %p98 = scmp.ne.s32.totalorder %s93, %s95
      %p99 = scmp.eq.s32.totalorder %s19, 0
      %p100 = por %p98, %p99
      %p101 = scmp.ne.s32.totalorder %s93, %s95
      %p102 = scmp.eq.s32.totalorder %s24, 1
      %p103 = por %p101, %p102
      %p104 = scmp.ne.s32.totalorder %s95, %s96
      %p105 = scmp.eq.s32.totalorder %s24, 0
      %p106 = por %p104, %p105
      %p107 = scmp.ne.s32.totalorder %s95, %s96
      %p108 = scmp.eq.s32.totalorder %s25, 1
      %p109 = por %p107, %p108
      %p111 = scmp.ne.s32.totalorder %s96, %s110
      %p112 = scmp.eq.s32.totalorder %s25, 0
      %p113 = por %p111, %p112
      %s115 = sadd.s32 %s114, 1
      %p118 = scmp.eq.s32.totalorder %s19, 1
      %p119 = scmp.ne.s32.totalorder %s114, %s116
      %p120 = scmp.eq.s32.totalorder %s19, 0
      %p121 = por %p119, %p120
      %p122 = scmp.ne.s32.totalorder %s114, %s116
      %p123 = scmp.eq.s32.totalorder %s24, 1
      %p124 = por %p122, %p123
      %p125 = scmp.ne.s32.totalorder %s116, %s117
      %p126 = scmp.eq.s32.totalorder %s24, 0
      %p127 = por %p125, %p126
      %p128 = scmp.ne.s32.totalorder %s116, %s117
      %p129 = scmp.eq.s32.totalorder %s25, 1
      %p130 = por %p128, %p129
      %p132 = scmp.ne.s32.totalorder %s117, %s131
      %p133 = scmp.eq.s32.totalorder %s25, 0
      %p134 = por %p132, %p133
      %s136 = sadd.s32 %s135, 1
      %p139 = scmp.eq.s32.totalorder %s19, 1
      %p140 = scmp.ne.s32.totalorder %s135, %s137
      %p141 = scmp.eq.s32.totalorder %s19, 0
      %p142 = por %p140, %p141
      %p143 = scmp.ne.s32.totalorder %s135, %s137
      %p144 = scmp.eq.s32.totalorder %s24, 1
      %p145 = por %p143, %p144
      %p146 = scmp.ne.s32.totalorder %s137, %s138
      %p147 = scmp.eq.s32.totalorder %s24, 0
      %p148 = por %p146, %p147
      %p149 = scmp.ne.s32.totalorder %s137, %s138
      %p150 = scmp.eq.s32.totalorder %s25, 1
      %p151 = por %p149, %p150
      %p153 = scmp.ne.s32.totalorder %s138, %s152
      %p154 = scmp.eq.s32.totalorder %s25, 0
      %p155 = por %p153, %p154
      %s157 = sadd.s32 %s156, 1
      %p160 = scmp.eq.s32.totalorder %s19, 1
      %p161 = scmp.ne.s32.totalorder %s156, %s158
      %p162 = scmp.eq.s32.totalorder %s19, 0
      %p163 = por %p161, %p162
      %p164 = scmp.ne.s32.totalorder %s156, %s158
      %p165 = scmp.eq.s32.totalorder %s24, 1
      %p166 = por %p164, %p165
      %p167 = scmp.ne.s32.totalorder %s158, %s159
      %p168 = scmp.eq.s32.totalorder %s24, 0
      %p169 = por %p167, %p168
      %p170 = scmp.ne.s32.totalorder %s158, %s159
      %p171 = scmp.eq.s32.totalorder %s25, 1
      %p172 = por %p170, %p171
      %p174 = scmp.ne.s32.totalorder %s159, %s173
      %p175 = scmp.eq.s32.totalorder %s25, 0
      %p176 = por %p174, %p175
      %s177 = ssub.s32 %s26, %s38
      %s178 = ssub.s32 %s27, %s34
      %s179 = sor.u32 %s177, %s178
      %p180 = scmp.eq.s32.totalorder %s179, 0
      %s182 = sadd.s32 %s181, 1
      %s183 = scalar_select %p180, %s181, %s182
      %p186 = pneg %p180
      %p187 = scmp.eq.s32.totalorder %s19, 1
      %p188 = por %p186, %p187
      %p189 = scmp.ne.s32.totalorder %s181, %s184
      %p190 = scmp.eq.s32.totalorder %s19, 0
      %p191 = por %p189, %p190
      %p192 = scmp.ne.s32.totalorder %s181, %s184
      %p193 = scmp.eq.s32.totalorder %s24, 1
      %p194 = por %p192, %p193
      %p195 = scmp.ne.s32.totalorder %s184, %s185
      %p196 = scmp.eq.s32.totalorder %s24, 0
      %p197 = por %p195, %p196
      %p198 = scmp.ne.s32.totalorder %s184, %s185
      %p199 = scmp.eq.s32.totalorder %s25, 1
      %p200 = por %p198, %p199
      %p202 = scmp.ne.s32.totalorder %s185, %s201
      %p203 = scmp.eq.s32.totalorder %s25, 0
      %p204 = por %p202, %p203
      %p205 = scmp.le.s32.totalorder 1, %s19
      %p206 = scmp.lt.s32.totalorder %s19, 3
      %p207 = pnand %p205, %p206
      %p208 = pneg %p207
      // Predicated region
      $region9: #{tpu_custom_call.1} parent=5 // pred_check
        _
      $region10: #{tpu_custom_call.1} parent=5 // pred_check_branch
        %210 = sbr.rel (%p207) target = $region12
      $region11: #{tpu_custom_call.1} parent=5 // pred_region
        %s211 = ssub.s32 %s19, 1
        // Predicated region
        $region13: #{tpu_custom_call.1} parent=11 // pred_check
          %p212 = pneg %p106
        $region14: #{tpu_custom_call.1} parent=11 // pred_check_branch
          %214 = sbr.rel (%p212) target = $region16
        $region15: #{tpu_custom_call.1} parent=11 // pred_region
          _
        $region16: #{tpu_custom_call.1} parent=11 // pred_fallthru
          _
        // Predicated region
        $region17: #{tpu_custom_call.1} parent=11 // pred_check
          %p215 = pneg %p127
        $region18: #{tpu_custom_call.1} parent=11 // pred_check_branch
          %217 = sbr.rel (%p215) target = $region20
        $region19: #{tpu_custom_call.1} parent=11 // pred_region
          _
        $region20: #{tpu_custom_call.1} parent=11 // pred_fallthru
          _
        // Predicated region
        $region21: #{tpu_custom_call.1} parent=11 // pred_check
          %p218 = pneg %p148
        $region22: #{tpu_custom_call.1} parent=11 // pred_check_branch
          %220 = sbr.rel (%p218) target = $region24
        $region23: #{tpu_custom_call.1} parent=11 // pred_region
          _
        $region24: #{tpu_custom_call.1} parent=11 // pred_fallthru
          _
        // Predicated region
        $region25: #{tpu_custom_call.1} parent=11 // pred_check
          %p221 = pneg %p169
        $region26: #{tpu_custom_call.1} parent=11 // pred_check_branch
          %223 = sbr.rel (%p221) target = $region28
        $region27: #{tpu_custom_call.1} parent=11 // pred_region
          _
        $region28: #{tpu_custom_call.1} parent=11 // pred_fallthru
          _
      $region12: #{tpu_custom_call.1} parent=5 // pred_fallthru
        _
      %p224 = scmp.lt.s32.totalorder %s19, 2
      // Predicated region
      $region29: #{tpu_custom_call.1} parent=5 // pred_check
        %p225 = pneg %p224
      $region30: #{tpu_custom_call.1} parent=5 // pred_check_branch
        %227 = sbr.rel (%p225) target = $region32
      $region31: #{tpu_custom_call.1} parent=5 // pred_region
        // Predicated region
        $region33: #{tpu_custom_call.1} parent=31 // pred_check
          %p228 = pneg %p53
        $region34: #{tpu_custom_call.1} parent=31 // pred_check_branch
          %230 = sbr.rel (%p228) target = $region36
        $region35: #{tpu_custom_call.1} parent=31 // pred_region
          %s231 = sand.u32 %s43, 1
          %s232 = scalar_lea.sflag [#allocation6], %s231
          %s233 = sand.u32 %s43, 1
          %s234 = smul.addr %s233, 64
          %s235 = scalar_lea.vmem [#allocation5], %s234
          %s236 = smul.u32 8, %s27
          %s238 = ssub.s32 1024, 1024
          %239 = vsyncadd %s232, %s238
          %s240 = smul.addr %s26, 8
          %s241 = sadd.s32 %s236, %s240
          %s242 = smul.addr %s241, 128
          %s243 = scalar_lea.hbm %s0, %s242
          %s244 = sshll.u32 %s235, 4
          %s245 = int_to_ptr.vmem [resolvable:$true] %s244
          %250 = dma.hbm_to_vmem [thread:$0]  %s243, 1024, %s245, %s232, 128, 128, 8
        $region36: #{tpu_custom_call.1} parent=31 // pred_fallthru
          _
        // Predicated region
        $region37: #{tpu_custom_call.1} parent=31 // pred_check
          %p251 = pneg %p79
        $region38: #{tpu_custom_call.1} parent=31 // pred_check_branch
          %253 = sbr.rel (%p251) target = $region40
        $region39: #{tpu_custom_call.1} parent=31 // pred_region
          %p254 = scmp.lt.s32.totalorder %s26, 1
          %s255 = scalar_select %p254, %s26, 1
          %s256 = smul.addr %s255, 8
          %s257 = smul.addr %s256, 4
          %s258 = scalar_lea.vmem %s1, %s257
        $region40: #{tpu_custom_call.1} parent=31 // pred_fallthru
          _
      $region32: #{tpu_custom_call.1} parent=5 // pred_fallthru
        _
      %p259 = scmp.le.s32.totalorder 1, %s19
      %p260 = scmp.lt.s32.totalorder %s19, 3
      %p261 = pnand %p259, %p260
      %p262 = pneg %p261
      // Predicated region
      $region41: #{tpu_custom_call.1} parent=5 // pred_check
        _
      $region42: #{tpu_custom_call.1} parent=5 // pred_check_branch
        %264 = sbr.rel (%p261) target = $region44
      $region43: #{tpu_custom_call.1} parent=5 // pred_region
        %s265 = ssub.s32 %s19, 1
        %s266 = sand.u32 %s46, 1
        %s267 = scalar_lea.sflag [#allocation6], %s266
        %s268 = sand.u32 %s46, 1
        %s269 = smul.addr %s268, 64
        %s270 = scalar_lea.vmem [#allocation5], %s269
        // Predicated region
        $region45: #{tpu_custom_call.1} parent=43 // pred_check
          %p271 = pneg %p59
        $region46: #{tpu_custom_call.1} parent=43 // pred_check_branch
          %273 = sbr.rel (%p271) target = $region48
        $region47: #{tpu_custom_call.1} parent=43 // pred_region
          %274 = dma.done %s267, 1024
        $region48: #{tpu_custom_call.1} parent=43 // pred_fallthru
          _
        %s275 = sand.u32 %s46, 1
        %s276 = scalar_lea.sflag [#allocation6], %s275
        %s277 = sand.u32 %s46, 1
        %s278 = smul.addr %s277, 64
        %s279 = scalar_lea.vmem [#allocation5], %s278
        %p280 = pneg %p59
        %p281 = pneg %p56
        %p282 = scmp.lt.s32.totalorder %s28, 1
        %s283 = scalar_select %p282, %s28, 1
        %s284 = smul.addr %s283, 8
        %s285 = smul.addr %s284, 4
        %s286 = scalar_lea.vmem %s1, %s285
        %p287 = pneg %p85
        %p288 = pneg %p82
        %p289 = pneg %p106
        %p290 = pneg %p103
        %p291 = pneg %p127
        %p292 = pneg %p124
        %p293 = pneg %p148
        %p294 = pneg %p145
        %p295 = pneg %p169
        %p296 = pneg %p166
        %p297 = pneg %p197
        %p298 = pneg %p194
        %s299 = sand.u32 %s184, 1
        %s300 = scalar_lea.sflag [#allocation7], %s299
        %s301 = sand.u32 %s184, 1
        %s302 = smul.addr %s301, 64
        %s303 = scalar_lea.vmem [#allocation8], %s302
        %s304 = smul.u32 8, %s29
        %p305 = scmp.lt.s32.totalorder %s28, 1
        %s306 = scalar_select %p305, %s28, 1
        %s307 = smul.addr %s306, 8
        %s308 = smul.addr %s307, 4
        %s309 = scalar_lea.vmem %s1, %s308
        %s310 = smul.u32 8, %s29
        %p312 = scmp.eq.s32.totalorder %s29, 0
        // Predicated region
        $region49: #{tpu_custom_call.1} parent=43 // pred_check
          %p313 = pneg %p312
        $region50: #{tpu_custom_call.1} parent=43 // pred_check_branch
          %315 = sbr.rel (%p313) target = $region52
        $region51: #{tpu_custom_call.1} parent=43 // pred_region
          %v316 = vld [vmem:[%s3] sm:$0xf]
          %v317 = vld [vmem:[%s3 + $0x4] sm:$0xf]
          %v318 = vld [vmem:[%s3 + $0x8] sm:$0xf]
          %v319 = vld [vmem:[%s3 + $0xc] sm:$0xf]
          %v320 = vld [vmem:[%s3 + $0x10] sm:$0xf]
          %v321 = vld [vmem:[%s3 + $0x14] sm:$0xf]
          %v322 = vld [vmem:[%s3 + $0x18] sm:$0xf]
          %v323 = vld [vmem:[%s3 + $0x1c] sm:$0xf]
          %v324 = vld [vmem:[%s309] sm:$0xf]
          %v325 = vld [vmem:[%s309 + $0x4] sm:$0xf]
          %v328 = vunpack.c.l.b16 %v324
          %v329 = vunpack.c.l.b16 %v325
          %v330 = vpack.c.b16 %v329, %v328
          %v339 = vunpack.c.l.b16 %v316
          %v340 = vunpack.c.l.b16 %v317
          %v341 = vunpack.c.l.b16 %v318
          %v342 = vunpack.c.l.b16 %v319
          %v343 = vunpack.c.l.b16 %v320
          %v344 = vunpack.c.l.b16 %v321
          %v345 = vunpack.c.l.b16 %v322
          %v346 = vunpack.c.l.b16 %v323
          %v347 = vpack.c.b16 %v340, %v339
          %v348 = vpack.c.b16 %v342, %v341
          %v349 = vpack.c.b16 %v344, %v343
          %v350 = vpack.c.b16 %v346, %v345
          %vm355 = vcmask 523264
          %v357 = vsel %vm355, %v330, 0
          %359 = vmatprep.subr.bf16.mxu0 0
          %360 = vmatpush1.bf16.msra.mxu0 %v347
          %361 = vmatprep.subr.bf16.mxu0 0
          %362 = vmatpush1.bf16.msra.mxu0 %v348
          %363 = vmatprep.subr.bf16.mxu0 0
          %364 = vmatpush1.bf16.msra.mxu0 %v349
          %365 = vmatprep.subr.bf16.mxu0 0
          %366 = vmatpush1.bf16.msra.mxu0 %v350
          %367 = vmatprep.subr.bf16.mxu0 0
          %368 = vmatpush1.bf16.msra.mxu0 0
          %369 = vmatprep.subr.bf16.mxu0 0
          %370 = vmatpush1.bf16.msra.mxu0 0
          %371 = vmatprep.subr.bf16.mxu0 0
          %372 = vmatpush1.bf16.msra.mxu0 0
          %373 = vmatprep.subr.bf16.mxu0 0
          %374 = vmatpush1.bf16.msra.mxu0 0
          %375 = vmatprep.subr.bf16.mxu0 0
          %376 = vmatpush1.bf16.msra.mxu0 0
          %377 = vmatprep.subr.bf16.mxu0 0
          %378 = vmatpush1.bf16.msra.mxu0 0
          %379 = vmatprep.subr.bf16.mxu0 0
          %380 = vmatpush1.bf16.msra.mxu0 0
          %381 = vmatprep.subr.bf16.mxu0 0
          %382 = vmatpush1.bf16.msra.mxu0 0
          %383 = vmatprep.subr.bf16.mxu0 0
          %384 = vmatpush1.bf16.msra.mxu0 0
          %385 = vmatprep.subr.bf16.mxu0 0
          %386 = vmatpush1.bf16.msra.mxu0 0
          %387 = vmatprep.subr.bf16.mxu0 0
          %388 = vmatpush1.bf16.msra.mxu0 0
          %389 = vmatprep.subr.bf16.mxu0 0
          %390 = vmatpush1.bf16.msra.mxu0 0
          %391 = vmatprep.mubr.bf16.mxu0 0
          %392 = vmatmul.mubr.bf16.gmra.mrb[0].mxu0 %v357
          %v393 = vpop.f32.mrb[0].mxu0
          %v394 = vadd.f32 0.0, %v393
          %v395 = vpop.f32.mrb[0].mxu0
          %v396 = vpop.f32.mrb[0].mxu0
          %v397 = vadd.f32 0.0, %v396
          %v398 = vpop.f32.mrb[0].mxu0
          %399 = vdwg.mxu0
          %s400 = scalar_lea.vmem %s309, 8
          %v401 = vld [vmem:[%s400] sm:$0xf]
          %v402 = vld [vmem:[%s400 + $0x4] sm:$0xf]
          %v405 = vunpack.c.l.b16 %v401
          %v406 = vunpack.c.l.b16 %v402
          %v407 = vpack.c.b16 %v406, %v405
          %v409 = vsel %vm355, %v407, 0
          %411 = vmatprep.subr.bf16.mxu0 0
          %412 = vmatpush1.bf16.msra.mxu0 %v347
          %413 = vmatprep.subr.bf16.mxu0 0
          %414 = vmatpush1.bf16.msra.mxu0 %v348
          %415 = vmatprep.subr.bf16.mxu0 0
          %416 = vmatpush1.bf16.msra.mxu0 %v349
          %417 = vmatprep.subr.bf16.mxu0 0
          %418 = vmatpush1.bf16.msra.mxu0 %v350
          %419 = vmatprep.subr.bf16.mxu0 0
          %420 = vmatpush1.bf16.msra.mxu0 0
          %421 = vmatprep.subr.bf16.mxu0 0
          %422 = vmatpush1.bf16.msra.mxu0 0
          %423 = vmatprep.subr.bf16.mxu0 0
          %424 = vmatpush1.bf16.msra.mxu0 0
          %425 = vmatprep.subr.bf16.mxu0 0
          %426 = vmatpush1.bf16.msra.mxu0 0
          %427 = vmatprep.subr.bf16.mxu0 0
          %428 = vmatpush1.bf16.msra.mxu0 0
          %429 = vmatprep.subr.bf16.mxu0 0
          %430 = vmatpush1.bf16.msra.mxu0 0
          %431 = vmatprep.subr.bf16.mxu0 0
          %432 = vmatpush1.bf16.msra.mxu0 0
          %433 = vmatprep.subr.bf16.mxu0 0
          %434 = vmatpush1.bf16.msra.mxu0 0
          %435 = vmatprep.subr.bf16.mxu0 0
          %436 = vmatpush1.bf16.msra.mxu0 0
          %437 = vmatprep.subr.bf16.mxu0 0
          %438 = vmatpush1.bf16.msra.mxu0 0
          %439 = vmatprep.subr.bf16.mxu0 0
          %440 = vmatpush1.bf16.msra.mxu0 0
          %441 = vmatprep.subr.bf16.mxu0 0
          %442 = vmatpush1.bf16.msra.mxu0 0
          %443 = vmatprep.mubr.bf16.mxu0 0
          %444 = vmatmul.mubr.bf16.gmra.mrb[0].mxu0 %v409
          %v445 = vpop.f32.mrb[0].mxu0
          %v446 = vadd.f32 0.0, %v445
          %v447 = vpop.f32.mrb[0].mxu0
          %v448 = vpop.f32.mrb[0].mxu0
          %v449 = vadd.f32 0.0, %v448
          %v450 = vpop.f32.mrb[0].mxu0
          %451 = vdwg.mxu0
          %v452 = vmax.f32 %v394, %v446
          %v453 = vmax.f32 %v397, %v449
          %s454 = scalar_lea.vmem %s309, 16
          %v455 = vld [vmem:[%s454] sm:$0xf]
          %v456 = vld [vmem:[%s454 + $0x4] sm:$0xf]
          %v459 = vunpack.c.l.b16 %v455
          %v460 = vunpack.c.l.b16 %v456
          %v461 = vpack.c.b16 %v460, %v459
          %v463 = vsel %vm355, %v461, 0
          %465 = vmatprep.subr.bf16.mxu0 0
          %466 = vmatpush1.bf16.msra.mxu0 %v347
          %467 = vmatprep.subr.bf16.mxu0 0
          %468 = vmatpush1.bf16.msra.mxu0 %v348
          %469 = vmatprep.subr.bf16.mxu0 0
          %470 = vmatpush1.bf16.msra.mxu0 %v349
          %471 = vmatprep.subr.bf16.mxu0 0
          %472 = vmatpush1.bf16.msra.mxu0 %v350
          %473 = vmatprep.subr.bf16.mxu0 0
          %474 = vmatpush1.bf16.msra.mxu0 0
          %475 = vmatprep.subr.bf16.mxu0 0
          %476 = vmatpush1.bf16.msra.mxu0 0
          %477 = vmatprep.subr.bf16.mxu0 0
          %478 = vmatpush1.bf16.msra.mxu0 0
          %479 = vmatprep.subr.bf16.mxu0 0
          %480 = vmatpush1.bf16.msra.mxu0 0
          %481 = vmatprep.subr.bf16.mxu0 0
          %482 = vmatpush1.bf16.msra.mxu0 0
          %483 = vmatprep.subr.bf16.mxu0 0
          %484 = vmatpush1.bf16.msra.mxu0 0
          %485 = vmatprep.subr.bf16.mxu0 0
          %486 = vmatpush1.bf16.msra.mxu0 0
          %487 = vmatprep.subr.bf16.mxu0 0
          %488 = vmatpush1.bf16.msra.mxu0 0
          %489 = vmatprep.subr.bf16.mxu0 0
          %490 = vmatpush1.bf16.msra.mxu0 0
          %491 = vmatprep.subr.bf16.mxu0 0
          %492 = vmatpush1.bf16.msra.mxu0 0
          %493 = vmatprep.subr.bf16.mxu0 0
          %494 = vmatpush1.bf16.msra.mxu0 0
          %495 = vmatprep.subr.bf16.mxu0 0
          %496 = vmatpush1.bf16.msra.mxu0 0
          %497 = vmatprep.mubr.bf16.mxu0 0
          %498 = vmatmul.mubr.bf16.gmra.mrb[0].mxu0 %v463
          %v499 = vpop.f32.mrb[0].mxu0
          %v500 = vadd.f32 0.0, %v499
          %v501 = vpop.f32.mrb[0].mxu0
          %v502 = vpop.f32.mrb[0].mxu0
          %v503 = vadd.f32 0.0, %v502
          %v504 = vpop.f32.mrb[0].mxu0
          %505 = vdwg.mxu0
          %v506 = vmax.f32 %v452, %v500
          %v507 = vmax.f32 %v453, %v503
          %s508 = scalar_lea.vmem %s309, 24
          %v509 = vld [vmem:[%s508] sm:$0xf]
          %v510 = vld [vmem:[%s508 + $0x4] sm:$0xf]
          %v513 = vunpack.c.l.b16 %v509
          %v514 = vunpack.c.l.b16 %v510
          %v515 = vpack.c.b16 %v514, %v513
          %v517 = vsel %vm355, %v515, 0
          %519 = vmatprep.subr.bf16.mxu0 0
          %520 = vmatpush1.bf16.msra.mxu0 %v347
          %521 = vmatprep.subr.bf16.mxu0 0
          %522 = vmatpush1.bf16.msra.mxu0 %v348
          %523 = vmatprep.subr.bf16.mxu0 0
          %524 = vmatpush1.bf16.msra.mxu0 %v349
          %525 = vmatprep.subr.bf16.mxu0 0
          %526 = vmatpush1.bf16.msra.mxu0 %v350
          %527 = vmatprep.subr.bf16.mxu0 0
          %528 = vmatpush1.bf16.msra.mxu0 0
          %529 = vmatprep.subr.bf16.mxu0 0
          %530 = vmatpush1.bf16.msra.mxu0 0
          %531 = vmatprep.subr.bf16.mxu0 0
          %532 = vmatpush1.bf16.msra.mxu0 0
          %533 = vmatprep.subr.bf16.mxu0 0
          %534 = vmatpush1.bf16.msra.mxu0 0
          %535 = vmatprep.subr.bf16.mxu0 0
          %536 = vmatpush1.bf16.msra.mxu0 0
          %537 = vmatprep.subr.bf16.mxu0 0
          %538 = vmatpush1.bf16.msra.mxu0 0
          %539 = vmatprep.subr.bf16.mxu0 0
          %540 = vmatpush1.bf16.msra.mxu0 0
          %541 = vmatprep.subr.bf16.mxu0 0
          %542 = vmatpush1.bf16.msra.mxu0 0
          %543 = vmatprep.subr.bf16.mxu0 0
          %544 = vmatpush1.bf16.msra.mxu0 0
          %545 = vmatprep.subr.bf16.mxu0 0
          %546 = vmatpush1.bf16.msra.mxu0 0
          %547 = vmatprep.subr.bf16.mxu0 0
          %548 = vmatpush1.bf16.msra.mxu0 0
          %549 = vmatprep.subr.bf16.mxu0 0
          %550 = vmatpush1.bf16.msra.mxu0 0
          %551 = vmatprep.mubr.bf16.mxu0 0
          %552 = vmatmul.mubr.bf16.gmra.mrb[0].mxu0 %v517
          %v553 = vpop.f32.mrb[0].mxu0
          %v554 = vadd.f32 0.0, %v553
          %v555 = vpop.f32.mrb[0].mxu0
          %v556 = vpop.f32.mrb[0].mxu0
          %v557 = vadd.f32 0.0, %v556
          %v558 = vpop.f32.mrb[0].mxu0
          %559 = vdwg.mxu0
          %v560 = vmax.f32 %v506, %v554
          %v561 = vmax.f32 %v507, %v557
          %vm562 = vcmask 64512
          %563 = vst.msk [vmem:[#allocation2] sm:$0xff] %vm562, %v560
          %564 = vst.msk [vmem:[#allocation2 + $0x8] sm:$0xff] %vm562, %v561
          %v565 = vpack.c.bf16 %v561, %v560
          %567 = vrot.lane.b32.xlu0 %v565, 120
          %v568 = vpop.permute.xlu0 %567
          %vm570 = vcmask 261120
          %571 = vst.msk [vmem:[#allocation3] sm:$0xff] %vm570, %v568
        $region52: #{tpu_custom_call.1} parent=43 // pred_fallthru
          _
        %v572 = vld [vmem:[%s270] sm:$0xff]
        %v573 = vld [vmem:[%s270 + $0x8] sm:$0xff]
        %v574 = vld [vmem:[%s270 + $0x10] sm:$0xff]
        %v575 = vld [vmem:[%s270 + $0x18] sm:$0xff]
        %v576 = vld [vmem:[%s270 + $0x20] sm:$0xff]
        %v577 = vld [vmem:[%s270 + $0x28] sm:$0xff]
        %v578 = vld [vmem:[%s270 + $0x30] sm:$0xff]
        %v579 = vld [vmem:[%s270 + $0x38] sm:$0xff]
        %v580 = vpack.c.bf16 %v573, %v572
        %v581 = vpack.c.bf16 %v575, %v574
        %v582 = vpack.c.bf16 %v577, %v576
        %v583 = vpack.c.bf16 %v579, %v578
        %v584 = vld [vmem:[%s2] sm:$0xf]
        %v585 = vld [vmem:[%s2 + $0x4] sm:$0xf]
        %v586 = vld [vmem:[%s2 + $0x8] sm:$0xf]
        %v587 = vld [vmem:[%s2 + $0xc] sm:$0xf]
        %v588 = vld [vmem:[%s2 + $0x10] sm:$0xf]
        %v589 = vld [vmem:[%s2 + $0x14] sm:$0xf]
        %v590 = vld [vmem:[%s2 + $0x18] sm:$0xf]
        %v591 = vld [vmem:[%s2 + $0x1c] sm:$0xf]
        %v600 = vunpack.c.l.b16 %v584
        %v601 = vunpack.c.l.b16 %v585
        %v602 = vunpack.c.l.b16 %v586
        %v603 = vunpack.c.l.b16 %v587
        %v604 = vunpack.c.l.b16 %v588
        %v605 = vunpack.c.l.b16 %v589
        %v606 = vunpack.c.l.b16 %v590
        %v607 = vunpack.c.l.b16 %v591
        %v608 = vpack.c.b16 %v601, %v600
        %v609 = vpack.c.b16 %v603, %v602
        %v610 = vpack.c.b16 %v605, %v604
        %v611 = vpack.c.b16 %v607, %v606
        %vm616 = vcmask 523264
        %v618 = vsel %vm616, %v580, 0
        %v621 = vsel %vm616, %v581, 0
        %v624 = vsel %vm616, %v582, 0
        %v627 = vsel %vm616, %v583, 0
        %629 = vmatprep.subr.bf16.mxu0 0
        %630 = vmatpush1.bf16.msra.mxu0 %v608
        %631 = vmatprep.subr.bf16.mxu0 0
        %632 = vmatpush1.bf16.msra.mxu0 %v609
        %633 = vmatprep.subr.bf16.mxu0 0
        %634 = vmatpush1.bf16.msra.mxu0 %v610
        %635 = vmatprep.subr.bf16.mxu0 0
        %636 = vmatpush1.bf16.msra.mxu0 %v611
        %637 = vmatprep.subr.bf16.mxu0 0
        %638 = vmatpush1.bf16.msra.mxu0 0
        %639 = vmatprep.subr.bf16.mxu0 0
        %640 = vmatpush1.bf16.msra.mxu0 0
        %641 = vmatprep.subr.bf16.mxu0 0
        %642 = vmatpush1.bf16.msra.mxu0 0
        %643 = vmatprep.subr.bf16.mxu0 0
        %644 = vmatpush1.bf16.msra.mxu0 0
        %645 = vmatprep.subr.bf16.mxu0 0
        %646 = vmatpush1.bf16.msra.mxu0 0
        %647 = vmatprep.subr.bf16.mxu0 0
        %648 = vmatpush1.bf16.msra.mxu0 0
        %649 = vmatprep.subr.bf16.mxu0 0
        %650 = vmatpush1.bf16.msra.mxu0 0
        %651 = vmatprep.subr.bf16.mxu0 0
        %652 = vmatpush1.bf16.msra.mxu0 0
        %653 = vmatprep.subr.bf16.mxu0 0
        %654 = vmatpush1.bf16.msra.mxu0 0
        %655 = vmatprep.subr.bf16.mxu0 0
        %656 = vmatpush1.bf16.msra.mxu0 0
        %657 = vmatprep.subr.bf16.mxu0 0
        %658 = vmatpush1.bf16.msra.mxu0 0
        %659 = vmatprep.subr.bf16.mxu0 0
        %660 = vmatpush1.bf16.msra.mxu0 0
        %661 = vmatprep.mubr.bf16.mxu0 0
        %662 = vmatmul.mubr.bf16.gmra.mrb[0].mxu0 %v618
        %v663 = vpop.f32.mrb[0].mxu0
        %v664 = vadd.f32 0.0, %v663
        %v665 = vpop.f32.mrb[0].mxu0
        %v666 = vpop.f32.mrb[0].mxu0
        %v667 = vadd.f32 0.0, %v666
        %v668 = vpop.f32.mrb[0].mxu0
        %669 = vmatprep.mubr.bf16.mxu0 0
        %670 = vmatmul.mubr.bf16.gmra.mrb[0].mxu0 %v621
        %v671 = vpop.f32.mrb[0].mxu0
        %v672 = vadd.f32 0.0, %v671
        %v673 = vpop.f32.mrb[0].mxu0
        %v674 = vpop.f32.mrb[0].mxu0
        %v675 = vadd.f32 0.0, %v674
        %v676 = vpop.f32.mrb[0].mxu0
        %677 = vmatprep.mubr.bf16.mxu0 0
        %678 = vmatmul.mubr.bf16.gmra.mrb[0].mxu0 %v624
        %v679 = vpop.f32.mrb[0].mxu0
        %v680 = vadd.f32 0.0, %v679
        %v681 = vpop.f32.mrb[0].mxu0
        %v682 = vpop.f32.mrb[0].mxu0
        %v683 = vadd.f32 0.0, %v682
        %v684 = vpop.f32.mrb[0].mxu0
        %685 = vmatprep.mubr.bf16.mxu0 0
        %686 = vmatmul.mubr.bf16.gmra.mrb[0].mxu0 %v627
        %v687 = vpop.f32.mrb[0].mxu0
        %v688 = vadd.f32 0.0, %v687
        %v689 = vpop.f32.mrb[0].mxu0
        %v690 = vpop.f32.mrb[0].mxu0
        %v691 = vadd.f32 0.0, %v690
        %v692 = vpop.f32.mrb[0].mxu0
        %693 = vdwg.mxu0
        %v694 = vld [vmem:[#allocation2] sm:$0xff]
        %v695 = vld [vmem:[#allocation2 + $0x8] sm:$0xff]
        %vm696 = vcmask 64512
        %v698 = vsel %vm696, %v664, 0
        %v701 = vsel %vm696, %v667, 0
        %v704 = vsel %vm696, %v672, 0
        %v707 = vsel %vm696, %v675, 0
        %v710 = vsel %vm696, %v680, 0
        %v713 = vsel %vm696, %v683, 0
        %v716 = vsel %vm696, %v688, 0
        %v719 = vsel %vm696, %v691, 0
        %v722 = vsel %vm696, %v694, 0
        %v725 = vsel %vm696, %v695, 0
        %727 = vmatprep.subr.mxu0 0.0
        %728 = vmatpush1.xpose.msra.mxu0 %v722
        %729 = vmatprep.subr.mxu0 0.0
        %730 = vmatpush1.xpose.msra.mxu0 %v725
        %731 = vmatprep.subr.mxu0 0.0
        %732 = vmatpush1.xpose.msra.mxu0 0.0
        %733 = vmatprep.subr.mxu0 0.0
        %734 = vmatpush1.xpose.msra.mxu0 0.0
        %735 = vmatprep.subr.mxu0 0.0
        %736 = vmatpush1.xpose.msra.mxu0 0.0
        %737 = vmatprep.subr.mxu0 0.0
        %738 = vmatpush1.xpose.msra.mxu0 0.0
        %739 = vmatprep.subr.mxu0 0.0
        %740 = vmatpush1.xpose.msra.mxu0 0.0
        %741 = vmatprep.subr.mxu0 0.0
        %742 = vmatpush1.xpose.msra.mxu0 0.0
        %743 = vmatprep.subr.mxu0 0.0
        %744 = vmatpush1.xpose.msra.mxu0 0.0
        %745 = vmatprep.subr.mxu0 0.0
        %746 = vmatpush1.xpose.msra.mxu0 0.0
        %747 = vmatprep.subr.mxu0 0.0
        %748 = vmatpush1.xpose.msra.mxu0 0.0
        %749 = vmatprep.subr.mxu0 0.0
        %750 = vmatpush1.xpose.msra.mxu0 0.0
        %751 = vmatprep.subr.mxu0 0.0
        %752 = vmatpush1.xpose.msra.mxu0 0.0
        %753 = vmatprep.subr.mxu0 0.0
        %754 = vmatpush1.xpose.msra.mxu0 0.0
        %755 = vmatprep.subr.mxu0 0.0
        %756 = vmatpush1.xpose.msra.mxu0 0.0
        %757 = vmatprep.subr.mxu0 0.0
        %758 = vmatpush1.xpose.msra.mxu0 0.0
        %759 = vmatprep.subr.mxu0 0.0
        %760 = vmatpush1.xpose.msra.mxu0 0.0
        %761 = vmatprep.subr.mxu0 0.0
        %762 = vmatpush1.xpose.msra.mxu0 0.0
        %763 = vmatprep.subr.mxu0 0.0
        %764 = vmatpush1.xpose.msra.mxu0 0.0
        %765 = vmatprep.subr.mxu0 0.0
        %766 = vmatpush1.xpose.msra.mxu0 0.0
        %767 = vmatprep.subr.mxu0 0.0
        %768 = vmatpush1.xpose.msra.mxu0 0.0
        %769 = vmatprep.subr.mxu0 0.0
        %770 = vmatpush1.xpose.msra.mxu0 0.0
        %771 = vmatprep.subr.mxu0 0.0
        %772 = vmatpush1.xpose.msra.mxu0 0.0
        %773 = vmatprep.subr.mxu0 0.0
        %774 = vmatpush1.xpose.msra.mxu0 0.0
        %775 = vmatprep.subr.mxu0 0.0
        %776 = vmatpush1.xpose.msra.mxu0 0.0
        %777 = vmatprep.subr.mxu0 0.0
        %778 = vmatpush1.xpose.msra.mxu0 0.0
        %779 = vmatprep.subr.mxu0 0.0
        %780 = vmatpush1.xpose.msra.mxu0 0.0
        %781 = vmatprep.subr.mxu0 0.0
        %782 = vmatpush1.xpose.msra.mxu0 0.0
        %783 = vmatprep.subr.mxu0 0.0
        %784 = vmatpush1.xpose.msra.mxu0 0.0
        %785 = vmatprep.subr.mxu0 0.0
        %786 = vmatpush1.xpose.msra.mxu0 0.0
        %787 = vmatprep.subr.mxu0 0.0
        %788 = vmatpush1.xpose.msra.mxu0 0.0
        %789 = vmatprep.subr.mxu0 0.0
        %790 = vmatpush1.xpose.msra.mxu0 0.0
        %791 = vmatprep.mubr.f32.mxu0 0.0
        %792 = vmatmul.mubr.f32.gmra.mrb[0].mxu0 %v698
        %v793 = vpop.f32.mrb[0].mxu0
        %v794 = vadd.f32 0.0, %v793
        %v795 = vpop.f32.mrb[0].mxu0
        %796 = vmatprep.mubr.f32.mxu0 0.0
        %797 = vmatmul.mubr.f32.gmra.mrb[0].mxu0 %v701
        %v798 = vpop.f32.mrb[0].mxu0
        %v799 = vadd.f32 0.0, %v798
        %v800 = vpop.f32.mrb[0].mxu0
        %801 = vmatprep.mubr.f32.mxu0 0.0
        %802 = vmatmul.mubr.f32.gmra.mrb[0].mxu0 %v704
        %v803 = vpop.f32.mrb[0].mxu0
        %v804 = vadd.f32 0.0, %v803
        %v805 = vpop.f32.mrb[0].mxu0
        %806 = vmatprep.mubr.f32.mxu0 0.0
        %807 = vmatmul.mubr.f32.gmra.mrb[0].mxu0 %v707
        %v808 = vpop.f32.mrb[0].mxu0
        %v809 = vadd.f32 0.0, %v808
        %v810 = vpop.f32.mrb[0].mxu0
        %811 = vmatprep.mubr.f32.mxu0 0.0
        %812 = vmatmul.mubr.f32.gmra.mrb[0].mxu0 %v710
        %v813 = vpop.f32.mrb[0].mxu0
        %v814 = vadd.f32 0.0, %v813
        %v815 = vpop.f32.mrb[0].mxu0
        %816 = vmatprep.mubr.f32.mxu0 0.0
        %817 = vmatmul.mubr.f32.gmra.mrb[0].mxu0 %v713
        %v818 = vpop.f32.mrb[0].mxu0
        %v819 = vadd.f32 0.0, %v818
        %v820 = vpop.f32.mrb[0].mxu0
        %821 = vmatprep.mubr.f32.mxu0 0.0
        %822 = vmatmul.mubr.f32.gmra.mrb[0].mxu0 %v716
        %v823 = vpop.f32.mrb[0].mxu0
        %v824 = vadd.f32 0.0, %v823
        %v825 = vpop.f32.mrb[0].mxu0
        %826 = vmatprep.mubr.f32.mxu0 0.0
        %827 = vmatmul.mubr.f32.gmra.mrb[0].mxu0 %v719
        %v828 = vpop.f32.mrb[0].mxu0
        %v829 = vadd.f32 0.0, %v828
        %v830 = vpop.f32.mrb[0].mxu0
        %831 = vdwg.mxu0
        %vm832 = vcmask 130048
        %v833 = vsel %vm832, %v794, -inf
        %834 = vmax.xlane.f32.xlu0 %v833
        %v835 = vpop.xlane.xlu0 %834
        %v836 = vsel %vm832, %v799, -inf
        %837 = vmax.xlane.f32.xlu0 %v836
        %v838 = vpop.xlane.xlu0 %837
        %v839 = vsel %vm832, %v804, -inf
        %840 = vmax.xlane.f32.xlu0 %v839
        %v841 = vpop.xlane.xlu0 %840
        %v842 = vsel %vm832, %v809, -inf
        %843 = vmax.xlane.f32.xlu0 %v842
        %v844 = vpop.xlane.xlu0 %843
        %v845 = vsel %vm832, %v814, -inf
        %846 = vmax.xlane.f32.xlu0 %v845
        %v847 = vpop.xlane.xlu0 %846
        %v848 = vsel %vm832, %v819, -inf
        %849 = vmax.xlane.f32.xlu0 %v848
        %v850 = vpop.xlane.xlu0 %849
        %v851 = vsel %vm832, %v824, -inf
        %852 = vmax.xlane.f32.xlu0 %v851
        %v853 = vpop.xlane.xlu0 %852
        %v854 = vsel %vm832, %v829, -inf
        %855 = vmax.xlane.f32.xlu0 %v854
        %v856 = vpop.xlane.xlu0 %855
        %v857 = vsub.f32 %v794, %v835
        %v858 = vsub.f32 %v799, %v838
        %v859 = vsub.f32 %v804, %v841
        %v860 = vsub.f32 %v809, %v844
        %v861 = vsub.f32 %v814, %v847
        %v862 = vsub.f32 %v819, %v850
        %v863 = vsub.f32 %v824, %v853
        %v864 = vsub.f32 %v829, %v856
        %v865 = vmul.f32 %v857, 1.442695
        %v866 = vpow.pop %v865
        %v867 = vmul.f32 %v858, 1.442695
        %v868 = vpow.pop %v867
        %v869 = vmul.f32 %v859, 1.442695
        %v870 = vpow.pop %v869
        %v871 = vmul.f32 %v860, 1.442695
        %v872 = vpow.pop %v871
        %v873 = vmul.f32 %v861, 1.442695
        %v874 = vpow.pop %v873
        %v875 = vmul.f32 %v862, 1.442695
        %v876 = vpow.pop %v875
        %v877 = vmul.f32 %v863, 1.442695
        %v878 = vpow.pop %v877
        %v879 = vmul.f32 %v864, 1.442695
        %v880 = vpow.pop %v879
        %v881 = vsel %vm832, %v866, 0.0
        %882 = vadd.xlane.f32.xlu0 %v881
        %v883 = vpop.xlane.xlu0 %882
        %v884 = vsel %vm832, %v868, 0.0
        %885 = vadd.xlane.f32.xlu0 %v884
        %v886 = vpop.xlane.xlu0 %885
        %v887 = vsel %vm832, %v870, 0.0
        %888 = vadd.xlane.f32.xlu0 %v887
        %v889 = vpop.xlane.xlu0 %888
        %v890 = vsel %vm832, %v872, 0.0
        %891 = vadd.xlane.f32.xlu0 %v890
        %v892 = vpop.xlane.xlu0 %891
        %v893 = vsel %vm832, %v874, 0.0
        %894 = vadd.xlane.f32.xlu0 %v893
        %v895 = vpop.xlane.xlu0 %894
        %v896 = vsel %vm832, %v876, 0.0
        %897 = vadd.xlane.f32.xlu0 %v896
        %v898 = vpop.xlane.xlu0 %897
        %v899 = vsel %vm832, %v878, 0.0
        %900 = vadd.xlane.f32.xlu0 %v899
        %v901 = vpop.xlane.xlu0 %900
        %v902 = vsel %vm832, %v880, 0.0
        %903 = vadd.xlane.f32.xlu0 %v902
        %v904 = vpop.xlane.xlu0 %903
        %v905 = vrcp.pop %v883
        %v906 = vrcp.pop %v886
        %v907 = vrcp.pop %v889
        %v908 = vrcp.pop %v892
        %v909 = vrcp.pop %v895
        %v910 = vrcp.pop %v898
        %v911 = vrcp.pop %v901
        %v912 = vrcp.pop %v904
        %v913 = vpack.c.bf16 %v868, %v866
        %v914 = vpack.c.bf16 %v872, %v870
        %v915 = vpack.c.bf16 %v876, %v874
        %v916 = vpack.c.bf16 %v880, %v878
        %v917 = vld [vmem:[#allocation3] sm:$0xff]
        %v919 = vsel %vm832, %v913, 0
        %v922 = vsel %vm832, %v914, 0
        %v925 = vsel %vm832, %v915, 0
        %v928 = vsel %vm832, %v916, 0
        %930 = vmatprep.subr.bf16.mxu0 0
        %931 = vmatpush1.bf16.msra.mxu0 %v917
        %932 = vmatprep.subr.bf16.mxu0 0
        %933 = vmatpush1.bf16.msra.mxu0 0
        %934 = vmatprep.subr.bf16.mxu0 0
        %935 = vmatpush1.bf16.msra.mxu0 0
        %936 = vmatprep.subr.bf16.mxu0 0
        %937 = vmatpush1.bf16.msra.mxu0 0
        %938 = vmatprep.subr.bf16.mxu0 0
        %939 = vmatpush1.bf16.msra.mxu0 0
        %940 = vmatprep.subr.bf16.mxu0 0
        %941 = vmatpush1.bf16.msra.mxu0 0
        %942 = vmatprep.subr.bf16.mxu0 0
        %943 = vmatpush1.bf16.msra.mxu0 0
        %944 = vmatprep.subr.bf16.mxu0 0
        %945 = vmatpush1.bf16.msra.mxu0 0
        %946 = vmatprep.subr.bf16.mxu0 0
        %947 = vmatpush1.bf16.msra.mxu0 0
        %948 = vmatprep.subr.bf16.mxu0 0
        %949 = vmatpush1.bf16.msra.mxu0 0
        %950 = vmatprep.subr.bf16.mxu0 0
        %951 = vmatpush1.bf16.msra.mxu0 0
        %952 = vmatprep.subr.bf16.mxu0 0
        %953 = vmatpush1.bf16.msra.mxu0 0
        %954 = vmatprep.subr.bf16.mxu0 0
        %955 = vmatpush1.bf16.msra.mxu0 0
        %956 = vmatprep.subr.bf16.mxu0 0
        %957 = vmatpush1.bf16.msra.mxu0 0
        %958 = vmatprep.subr.bf16.mxu0 0
        %959 = vmatpush1.bf16.msra.mxu0 0
        %960 = vmatprep.subr.bf16.mxu0 0
        %961 = vmatpush1.bf16.msra.mxu0 0
        %962 = vmatprep.mubr.bf16.mxu0 0
        %963 = vmatmul.mubr.bf16.gmra.mrb[0].mxu0 %v919
        %v964 = vpop.f32.mrb[0].mxu0
        %v965 = vadd.f32 0.0, %v964
        %v966 = vpop.f32.mrb[0].mxu0
        %v967 = vpop.f32.mrb[0].mxu0
        %v968 = vadd.f32 0.0, %v967
        %v969 = vpop.f32.mrb[0].mxu0
        %970 = vmatprep.mubr.bf16.mxu0 0
        %971 = vmatmul.mubr.bf16.gmra.mrb[0].mxu0 %v922
        %v972 = vpop.f32.mrb[0].mxu0
        %v973 = vadd.f32 0.0, %v972
        %v974 = vpop.f32.mrb[0].mxu0
        %v975 = vpop.f32.mrb[0].mxu0
        %v976 = vadd.f32 0.0, %v975
        %v977 = vpop.f32.mrb[0].mxu0
        %978 = vmatprep.mubr.bf16.mxu0 0
        %979 = vmatmul.mubr.bf16.gmra.mrb[0].mxu0 %v925
        %v980 = vpop.f32.mrb[0].mxu0
        %v981 = vadd.f32 0.0, %v980
        %v982 = vpop.f32.mrb[0].mxu0
        %v983 = vpop.f32.mrb[0].mxu0
        %v984 = vadd.f32 0.0, %v983
        %v985 = vpop.f32.mrb[0].mxu0
        %986 = vmatprep.mubr.bf16.mxu0 0
        %987 = vmatmul.mubr.bf16.gmra.mrb[0].mxu0 %v928
        %v988 = vpop.f32.mrb[0].mxu0
        %v989 = vadd.f32 0.0, %v988
        %v990 = vpop.f32.mrb[0].mxu0
        %v991 = vpop.f32.mrb[0].mxu0
        %v992 = vadd.f32 0.0, %v991
        %v993 = vpop.f32.mrb[0].mxu0
        %994 = vdwg.mxu0
        %v995 = vmul.f32 %v965, %v905
        %v996 = vmul.f32 %v968, %v906
        %v997 = vmul.f32 %v973, %v907
        %v998 = vmul.f32 %v976, %v908
        %v999 = vmul.f32 %v981, %v909
        %v1000 = vmul.f32 %v984, %v910
        %v1001 = vmul.f32 %v989, %v911
        %v1002 = vmul.f32 %v992, %v912
        %v1003 = vpack.c.bf16 %v996, %v995
        %v1004 = vpack.c.bf16 %v998, %v997
        %v1005 = vpack.c.bf16 %v1000, %v999
        %v1006 = vpack.c.bf16 %v1002, %v1001
        %v1007 = vld [vmem:[%s4] sm:$0xf]
        %v1008 = vld [vmem:[%s4 + $0x4] sm:$0xf]
        %v1009 = vld [vmem:[%s4 + $0x8] sm:$0xf]
        %v1010 = vld [vmem:[%s4 + $0xc] sm:$0xf]
        %v1015 = vunpack.c.l.b16 %v1007
        %v1016 = vunpack.c.l.b16 %v1008
        %v1017 = vunpack.c.l.b16 %v1009
        %v1018 = vunpack.c.l.b16 %v1010
        %v1019 = vpack.c.b16 %v1016, %v1015
        %v1020 = vpack.c.b16 %v1018, %v1017
        %vm1023 = vcmask 261120
        %v1025 = vsel %vm1023, %v1003, 0
        %v1028 = vsel %vm1023, %v1004, 0
        %v1031 = vsel %vm1023, %v1005, 0
        %v1034 = vsel %vm1023, %v1006, 0
        %1036 = vmatprep.subr.bf16.mxu0 0
        %1037 = vmatpush1.bf16.msra.mxu0 %v1019
        %1038 = vmatprep.subr.bf16.mxu0 0
        %1039 = vmatpush1.bf16.msra.mxu0 %v1020
        %1040 = vmatprep.subr.bf16.mxu0 0
        %1041 = vmatpush1.bf16.msra.mxu0 0
        %1042 = vmatprep.subr.bf16.mxu0 0
        %1043 = vmatpush1.bf16.msra.mxu0 0
        %1044 = vmatprep.subr.bf16.mxu0 0
        %1045 = vmatpush1.bf16.msra.mxu0 0
        %1046 = vmatprep.subr.bf16.mxu0 0
        %1047 = vmatpush1.bf16.msra.mxu0 0
        %1048 = vmatprep.subr.bf16.mxu0 0
        %1049 = vmatpush1.bf16.msra.mxu0 0
        %1050 = vmatprep.subr.bf16.mxu0 0
        %1051 = vmatpush1.bf16.msra.mxu0 0
        %1052 = vmatprep.subr.bf16.mxu0 0
        %1053 = vmatpush1.bf16.msra.mxu0 0
        %1054 = vmatprep.subr.bf16.mxu0 0
        %1055 = vmatpush1.bf16.msra.mxu0 0
        %1056 = vmatprep.subr.bf16.mxu0 0
        %1057 = vmatpush1.bf16.msra.mxu0 0
        %1058 = vmatprep.subr.bf16.mxu0 0
        %1059 = vmatpush1.bf16.msra.mxu0 0
        %1060 = vmatprep.subr.bf16.mxu0 0
        %1061 = vmatpush1.bf16.msra.mxu0 0
        %1062 = vmatprep.subr.bf16.mxu0 0
        %1063 = vmatpush1.bf16.msra.mxu0 0
        %1064 = vmatprep.subr.bf16.mxu0 0
        %1065 = vmatpush1.bf16.msra.mxu0 0
        %1066 = vmatprep.subr.bf16.mxu0 0
        %1067 = vmatpush1.bf16.msra.mxu0 0
        %1068 = vmatprep.mubr.bf16.mxu0 0
        %1069 = vmatmul.mubr.bf16.gmra.mrb[0].mxu0 %v1025
        %v1070 = vpop.f32.mrb[0].mxu0
        %v1071 = vadd.f32 0.0, %v1070
        %v1072 = vpop.f32.mrb[0].mxu0
        %v1073 = vpop.f32.mrb[0].mxu0
        %v1074 = vadd.f32 0.0, %v1073
        %v1075 = vpop.f32.mrb[0].mxu0
        %1076 = vmatprep.mubr.bf16.mxu0 0
        %1077 = vmatmul.mubr.bf16.gmra.mrb[0].mxu0 %v1028
        %v1078 = vpop.f32.mrb[0].mxu0
        %v1079 = vadd.f32 0.0, %v1078
        %v1080 = vpop.f32.mrb[0].mxu0
        %v1081 = vpop.f32.mrb[0].mxu0
        %v1082 = vadd.f32 0.0, %v1081
        %v1083 = vpop.f32.mrb[0].mxu0
        %1084 = vmatprep.mubr.bf16.mxu0 0
        %1085 = vmatmul.mubr.bf16.gmra.mrb[0].mxu0 %v1031
        %v1086 = vpop.f32.mrb[0].mxu0
        %v1087 = vadd.f32 0.0, %v1086
        %v1088 = vpop.f32.mrb[0].mxu0
        %v1089 = vpop.f32.mrb[0].mxu0
        %v1090 = vadd.f32 0.0, %v1089
        %v1091 = vpop.f32.mrb[0].mxu0
        %1092 = vmatprep.mubr.bf16.mxu0 0
        %1093 = vmatmul.mubr.bf16.gmra.mrb[0].mxu0 %v1034
        %v1094 = vpop.f32.mrb[0].mxu0
        %v1095 = vadd.f32 0.0, %v1094
        %v1096 = vpop.f32.mrb[0].mxu0
        %v1097 = vpop.f32.mrb[0].mxu0
        %v1098 = vadd.f32 0.0, %v1097
        %v1099 = vpop.f32.mrb[0].mxu0
        %1100 = vdwg.mxu0
        %s1101 = sld [smem:[#allocation4]]
        %v1102 = vstv %s1101
        %v1103 = vmul.f32 %v1102, %v1071
        %v1104 = vmul.f32 %v1102, %v1074
        %v1105 = vmul.f32 %v1102, %v1079
        %v1106 = vmul.f32 %v1102, %v1082
        %v1107 = vmul.f32 %v1102, %v1087
        %v1108 = vmul.f32 %v1102, %v1090
        %v1109 = vmul.f32 %v1102, %v1095
        %v1110 = vmul.f32 %v1102, %v1098
        %v1111 = vadd.f32 %v572, %v1103
        %v1112 = vadd.f32 %v573, %v1104
        %v1113 = vadd.f32 %v574, %v1105
        %v1114 = vadd.f32 %v575, %v1106
        %v1115 = vadd.f32 %v576, %v1107
        %v1116 = vadd.f32 %v577, %v1108
        %v1117 = vadd.f32 %v578, %v1109
        %v1118 = vadd.f32 %v579, %v1110
        %1119 = vst.msk [vmem:[%s303] sm:$0xff] %vm616, %v1111
        %1120 = vst.msk [vmem:[%s303 + $0x8] sm:$0xff] %vm616, %v1112
        %1121 = vst.msk [vmem:[%s303 + $0x10] sm:$0xff] %vm616, %v1113
        %1122 = vst.msk [vmem:[%s303 + $0x18] sm:$0xff] %vm616, %v1114
        %1123 = vst.msk [vmem:[%s303 + $0x20] sm:$0xff] %vm616, %v1115
        %1124 = vst.msk [vmem:[%s303 + $0x28] sm:$0xff] %vm616, %v1116
        %1125 = vst.msk [vmem:[%s303 + $0x30] sm:$0xff] %vm616, %v1117
        %1126 = vst.msk [vmem:[%s303 + $0x38] sm:$0xff] %vm616, %v1118
        %s1127 = sand.u32 %s184, 1
        %s1128 = scalar_lea.sflag [#allocation7], %s1127
        %s1129 = sand.u32 %s184, 1
        %s1130 = smul.addr %s1129, 64
        %s1131 = scalar_lea.vmem [#allocation8], %s1130
        // Predicated region
        $region53: #{tpu_custom_call.1} parent=43 // pred_check
          %p1132 = pneg %p194
        $region54: #{tpu_custom_call.1} parent=43 // pred_check_branch
          %1134 = sbr.rel (%p1132) target = $region56
        $region55: #{tpu_custom_call.1} parent=43 // pred_region
          %s1135 = smul.u32 8, %s29
          %s1137 = ssub.s32 1024, 1024
          %1138 = vsyncadd %s1128, %s1137
          %s1139 = smul.addr %s28, 8
          %s1140 = sadd.s32 %s1135, %s1139
          %s1141 = smul.addr %s1140, 128
          %s1142 = scalar_lea.hbm %s6, %s1141
          %s1143 = sshll.u32 %s1131, 4
          %s1144 = int_to_ptr.vmem [resolvable:$true] %s1143
          %1149 = dma.vmem_to_hbm [thread:$0]  %s1144, 1024, %s1142, %s1128, 128, 128, 8
        $region56: #{tpu_custom_call.1} parent=43 // pred_fallthru
          _
      $region44: #{tpu_custom_call.1} parent=5 // pred_fallthru
        _
      %p1150 = scmp.le.s32.totalorder 2, %s19
      // Predicated region
      $region57: #{tpu_custom_call.1} parent=5 // pred_check
        %p1151 = pneg %p1150
      $region58: #{tpu_custom_call.1} parent=5 // pred_check_branch
        %1153 = sbr.rel (%p1151) target = $region60
      $region59: #{tpu_custom_call.1} parent=5 // pred_region
        %s1154 = ssub.s32 %s19, 2
        // Predicated region
        $region61: #{tpu_custom_call.1} parent=59 // pred_check
          %p1155 = pneg %p200
        $region62: #{tpu_custom_call.1} parent=59 // pred_check_branch
          %1157 = sbr.rel (%p1155) target = $region64
        $region63: #{tpu_custom_call.1} parent=59 // pred_region
          %s1158 = sand.u32 %s185, 1
          %s1159 = scalar_lea.sflag [#allocation7], %s1158
          %s1160 = sand.u32 %s185, 1
          %s1161 = smul.addr %s1160, 64
          %s1162 = scalar_lea.vmem [#allocation8], %s1161
          %1163 = dma.done %s1159, 1024
        $region64: #{tpu_custom_call.1} parent=59 // pred_fallthru
          _
      $region60: #{tpu_custom_call.1} parent=5 // pred_fallthru
        _
    $region6: #{tpu_custom_call.1} parent=1 // loop_footer
      %s23 = sadd.s32 1, %s19
    $region7: #{tpu_custom_call.1} parent=1 // loop_footer_branch
      %18 = sbr.rel target = $region3
    $region8: #{tpu_custom_call.1} parent=1 // loop_exit
      _
    %1164 = vsyncpa [#allocation6], 1
    %s1165 = scalar_lea.sflag [#allocation6], 1
    %1166 = vsyncpa %s1165, 1
    %1167 = vsyncpa [#allocation7], 1
    %s1168 = scalar_lea.sflag [#allocation7], 1
    %1169 = vsyncpa %s1168, 1

</llo_original>
